<compile_context>
chip_gen: v5e
topology: v5e:2x2
jax: 0.10.0
libtpu: 0.0.40
codegen_flags: <defaults>
</compile_context>

<pallas_src>
import functools

import jax
import jax.numpy as jnp
from jax.experimental import pallas as pl
from jax.experimental.pallas import tpu as pltpu


def _pick_row_tile(n_rows, max_rows=1024):
    """Largest row tile that is a multiple of 8 (or the full extent) and divides n_rows."""
    if n_rows <= max_rows:
        return n_rows
    start = max_rows - max_rows % 8
    for t in range(start, 7, -8):
        if n_rows % t == 0:
            return t
    return n_rows  # no aligned divisor; fall back to the full (legal) extent


def _reorg_kernel(x_ref, o_ref, *, W, Wo, s):
    """One (batch, row-tile) grid step.

    x_ref: (1, T, s*W)     rows = (c, ho) tile, lanes = dh*W + (wo*s + dw)
    o_ref: (1, s*s, T, Wo) o[0, dh*s+dw, t, wo] = x[0, t, dh*W + wo*s + dw]
    """
    dtype = x_ref.dtype
    # (W, Wo) one-hot selectors, one per dw: sel[w, wo] = 1 iff w == wo*s + dw.
    # Built once per step from iotas (hoisted out of the loops below).
    w_iota = jax.lax.broadcasted_iota(jnp.int32, (W, Wo), 0)
    wo_iota = jax.lax.broadcasted_iota(jnp.int32, (W, Wo), 1)
    sels = [(w_iota == wo_iota * s + dw).astype(dtype) for dw in range(s)]

    for dh in range(s):
        # dh selection = static, contiguous lane slice (no strided / dynamic lane access).
        row = x_ref[0, :, dh * W:(dh + 1) * W]                    # (T, W)
        for dw in range(s):
            # Lane de-interleave (w = wo*s + dw  ->  wo) via a tiny one-hot MXU pass.
            # Exact: each output element is x*1.0 plus zeros; HIGHEST keeps f32 un-truncated.
            g = jnp.dot(row, sels[dw],
                        precision=jax.lax.Precision.HIGHEST,
                        preferred_element_type=jnp.float32)       # (T, Wo)
            # Regrouping to (b, sc, c, ho, wo) is done by the output BlockSpec; this store is
            # a full, contiguous (T, Wo) block write.
            o_ref[0, dh * s + dw] = g.astype(o_ref.dtype)


def reorg_forward(x, stride=2):
    assert x.ndim == 4
    B, C, H, W = x.shape
    s = int(stride)
    assert H % s == 0, 'The stride ' + str(s) + ' is not a proper divisor of height ' + str(H)
    assert W % s == 0, 'The stride ' + str(s) + ' is not a proper divisor of width ' + str(W)
    # TODO(synk): integer dtypes would need a non-MXU copy path (one-hot matmul is only exact
    # for floating inputs); YOLO feature maps are float so only the float path is implemented.
    Ho, Wo = H // s, W // s
    n_rows = C * Ho
    T = _pick_row_tile(n_rows)
    R = n_rows // T
    itemsize = jnp.dtype(x.dtype).itemsize

    # Free row-major views only (no data movement in the wrapper).
    x3 = x.reshape(B, n_rows, s * W)          # rows = (c, ho), lanes = (dh, w)

    # VMEM budget derived from the actual padded, double-buffered tiles (v7x-safe cap).
    def rup(a, m):
        return -(-a // m) * m
    in_blk = rup(T, 8) * rup(s * W, 128) * itemsize
    out_blk = s * s * rup(T, 8) * rup(Wo, 128) * itemsize
    vmem_limit = int(min(32 * 2**20, max(4 * 2**20, 3 * (in_blk + out_blk) + (2 << 20))))

    kernel = functools.partial(_reorg_kernel, W=W, Wo=Wo, s=s)
    out4 = pl.pallas_call(
        kernel,
        out_shape=jax.ShapeDtypeStruct((B, s * s, n_rows, Wo), x.dtype),
        grid=(B, R),
        in_specs=[pl.BlockSpec((1, T, s * W), lambda b, r: (b, r, 0))],
        out_specs=pl.BlockSpec((1, s * s, T, Wo), lambda b, r: (b, 0, r, 0)),
        compiler_params=pltpu.CompilerParams(
            dimension_semantics=("parallel", "parallel"),
            vmem_limit_bytes=vmem_limit),
        cost_estimate=pl.CostEstimate(
            flops=2 * B * C * H * W * Wo,                  # tiny one-hot dots; op is HBM-bound
            transcendentals=0,
            bytes_accessed=2 * B * C * H * W * itemsize),  # read once + write once
    )(x3)
    return out4.reshape(B, s * s * C, Ho, Wo)              # free row-major view


_reorg_forward_jit = jax.jit(reorg_forward, static_argnames=("stride",))


class ReOrgLayer:
    """Pallas/JAX equivalent of the PyTorch ReOrgLayer module."""

    def __init__(self, stride=2):
        self.stride = stride

    def forward(self, x):
        return _reorg_forward_jit(x, stride=self.stride)

    __call__ = forward


def _reorg_reference(x, stride):
    # Pure-jnp mirror of the PyTorch view/transpose chain (for the in-script check).
    B, C, H, W = x.shape
    s = stride
    y = x.reshape(B, C, H // s, s, W // s, s)
    y = jnp.transpose(y, (0, 3, 5, 1, 2, 4))     # (B, s, s, C, Ho, Wo)
    return y.reshape(B, C * s * s, H // s, W // s)


if __name__ == "__main__":
    key = jax.random.PRNGKey(0)
    B, C, H, W = 2, 4, 16, 16
    stride = 2
    x = jax.random.normal(key, (B, C, H, W), jnp.float32)

    layer = ReOrgLayer(stride=stride)
    out = jax.block_until_ready(layer(x))

    assert out.shape == (B, C * stride * stride, H // stride, W // stride), out.shape
    ref = _reorg_reference(x, stride)
    max_err = float(jnp.max(jnp.abs(out - ref)))
    assert max_err <= 1e-6, f"max abs error {max_err}"
    print("KERNEL_OK")
</pallas_src>

<mosaic_0001>
module attributes {stable_mosaic.version = 11 : i64} {
  func.func @_reorg_kernel(%arg0: i32, %arg1: i32, %arg2: memref<1x32x32xf32, #tpu.memory_space<vmem>>, %arg3: memref<1x4x32x8xf32, #tpu.memory_space<vmem>>) attributes {dimension_semantics = [#tpu.dimension_semantics<parallel>, #tpu.dimension_semantics<parallel>], iteration_bounds = array<i64: 2, 1>, scalar_prefetch = 0 : i64, scratch_operands = 0 : i64, tpu.core_type = #tpu.core_type<tc>, window_params = [{transform_indices = @transform_0, window_bounds = array<i64: 1, 32, 32>}, {transform_indices = @transform_1, window_bounds = array<i64: 1, 4, 32, 8>}]} {
    %0 = tpu.iota {dimensions = array<i32: 0>} : vector<16x8xi32>
    %1 = tpu.iota {dimensions = array<i32: 1>} : vector<16x8xi32>
    %c2_i32 = arith.constant 2 : i32
    %2 = vector.broadcast %c2_i32 : i32 to vector<16x8xi32>
    %3 = arith.muli %1, %2 : vector<16x8xi32>
    %c0_i32 = arith.constant 0 : i32
    %4 = vector.broadcast %c0_i32 : i32 to vector<16x8xi32>
    %5 = arith.addi %3, %4 : vector<16x8xi32>
    %6 = arith.cmpi eq, %0, %5 : vector<16x8xi32>
    %7 = arith.extui %6 : vector<16x8xi1> to vector<16x8xi32>
    %8 = arith.sitofp %7 : vector<16x8xi32> to vector<16x8xf32>
    %c2_i32_0 = arith.constant 2 : i32
    %9 = vector.broadcast %c2_i32_0 : i32 to vector<16x8xi32>
    %10 = arith.muli %1, %9 : vector<16x8xi32>
    %c1_i32 = arith.constant 1 : i32
    %11 = vector.broadcast %c1_i32 : i32 to vector<16x8xi32>
    %12 = arith.addi %10, %11 : vector<16x8xi32>
    %13 = arith.cmpi eq, %0, %12 : vector<16x8xi32>
    %14 = arith.extui %13 : vector<16x8xi1> to vector<16x8xi32>
    %15 = arith.sitofp %14 : vector<16x8xi32> to vector<16x8xf32>
    %c0 = arith.constant 0 : index
    %c0_1 = arith.constant 0 : index
    %c0_2 = arith.constant 0 : index
    %16 = vector.load %arg2[%c0, %c0_1, %c0_2] : memref<1x32x32xf32, #tpu.memory_space<vmem>>, vector<1x32x16xf32>
    %17 = vector.shape_cast %16 : vector<1x32x16xf32> to vector<32x16xf32>
    %cst = arith.constant dense<0.000000e+00> : vector<32x8xf32>
    %18 = tpu.matmul %17, %8, %cst {dimension_numbers = #tpu.dot_dimension_numbers<[1], [0], [0], [1], [0, 0, 1, 1], [], []>, precision = #tpu.contract_precision<fp32>} : vector<32x16xf32>, vector<16x8xf32>, vector<32x8xf32> -> vector<32x8xf32>
    %c0_3 = arith.constant 0 : index
    %c0_4 = arith.constant 0 : index
    %c0_5 = arith.constant 0 : index
    %c0_6 = arith.constant 0 : index
    %19 = vector.load %arg3[%c0_3, %c0_4, %c0_5, %c0_6] : memref<1x4x32x8xf32, #tpu.memory_space<vmem>>, vector<1x1x32x8xf32>
    %20 = vector.shape_cast %19 : vector<1x1x32x8xf32> to vector<32x8xf32>
    %21 = vector.shape_cast %18 : vector<32x8xf32> to vector<1x1x32x8xf32>
    tpu.vector_store %arg3[%c0_3, %c0_4, %c0_5, %c0_6], %21 {strides = array<i32>} : memref<1x4x32x8xf32, #tpu.memory_space<vmem>>, vector<1x1x32x8xf32>,
    %cst_7 = arith.constant dense<0.000000e+00> : vector<32x8xf32>
    %22 = tpu.matmul %17, %15, %cst_7 {dimension_numbers = #tpu.dot_dimension_numbers<[1], [0], [0], [1], [0, 0, 1, 1], [], []>, precision = #tpu.contract_precision<fp32>} : vector<32x16xf32>, vector<16x8xf32>, vector<32x8xf32> -> vector<32x8xf32>
    %c0_8 = arith.constant 0 : index
    %c1 = arith.constant 1 : index
    %c0_9 = arith.constant 0 : index
    %c0_10 = arith.constant 0 : index
    %23 = vector.load %arg3[%c0_8, %c1, %c0_9, %c0_10] : memref<1x4x32x8xf32, #tpu.memory_space<vmem>>, vector<1x1x32x8xf32>
    %24 = vector.shape_cast %23 : vector<1x1x32x8xf32> to vector<32x8xf32>
    %25 = vector.shape_cast %22 : vector<32x8xf32> to vector<1x1x32x8xf32>
    tpu.vector_store %arg3[%c0_8, %c1, %c0_9, %c0_10], %25 {strides = array<i32>} : memref<1x4x32x8xf32, #tpu.memory_space<vmem>>, vector<1x1x32x8xf32>,
    %c0_11 = arith.constant 0 : index
    %c0_12 = arith.constant 0 : index
    %c16 = arith.constant 16 : index
    %26 = vector.load %arg2[%c0_11, %c0_12, %c16] : memref<1x32x32xf32, #tpu.memory_space<vmem>>, vector<1x32x16xf32>
    %27 = vector.shape_cast %26 : vector<1x32x16xf32> to vector<32x16xf32>
    %cst_13 = arith.constant dense<0.000000e+00> : vector<32x8xf32>
    %28 = tpu.matmul %27, %8, %cst_13 {dimension_numbers = #tpu.dot_dimension_numbers<[1], [0], [0], [1], [0, 0, 1, 1], [], []>, precision = #tpu.contract_precision<fp32>} : vector<32x16xf32>, vector<16x8xf32>, vector<32x8xf32> -> vector<32x8xf32>
    %c0_14 = arith.constant 0 : index
    %c2 = arith.constant 2 : index
    %c0_15 = arith.constant 0 : index
    %c0_16 = arith.constant 0 : index
    %29 = vector.load %arg3[%c0_14, %c2, %c0_15, %c0_16] : memref<1x4x32x8xf32, #tpu.memory_space<vmem>>, vector<1x1x32x8xf32>
    %30 = vector.shape_cast %29 : vector<1x1x32x8xf32> to vector<32x8xf32>
    %31 = vector.shape_cast %28 : vector<32x8xf32> to vector<1x1x32x8xf32>
    tpu.vector_store %arg3[%c0_14, %c2, %c0_15, %c0_16], %31 {strides = array<i32>} : memref<1x4x32x8xf32, #tpu.memory_space<vmem>>, vector<1x1x32x8xf32>,
    %cst_17 = arith.constant dense<0.000000e+00> : vector<32x8xf32>
    %32 = tpu.matmul %27, %15, %cst_17 {dimension_numbers = #tpu.dot_dimension_numbers<[1], [0], [0], [1], [0, 0, 1, 1], [], []>, precision = #tpu.contract_precision<fp32>} : vector<32x16xf32>, vector<16x8xf32>, vector<32x8xf32> -> vector<32x8xf32>
    %c0_18 = arith.constant 0 : index
    %c3 = arith.constant 3 : index
    %c0_19 = arith.constant 0 : index
    %c0_20 = arith.constant 0 : index
    %33 = vector.load %arg3[%c0_18, %c3, %c0_19, %c0_20] : memref<1x4x32x8xf32, #tpu.memory_space<vmem>>, vector<1x1x32x8xf32>
    %34 = vector.shape_cast %33 : vector<1x1x32x8xf32> to vector<32x8xf32>
    %35 = vector.shape_cast %32 : vector<32x8xf32> to vector<1x1x32x8xf32>
    tpu.vector_store %arg3[%c0_18, %c3, %c0_19, %c0_20], %35 {strides = array<i32>} : memref<1x4x32x8xf32, #tpu.memory_space<vmem>>, vector<1x1x32x8xf32>,
    return
  }
  func.func @transform_0(%arg0: i32, %arg1: i32) -> (i32, i32, i32) {
    %c0_i32 = arith.constant 0 : i32
    %c0_i32_0 = arith.constant 0 : i32
    return %arg0, %arg1, %c0_i32 : i32, i32, i32
  }
  func.func @transform_1(%arg0: i32, %arg1: i32) -> (i32, i32, i32, i32) {
    %c0_i32 = arith.constant 0 : i32
    %c0_i32_0 = arith.constant 0 : i32
    %c0_i32_1 = arith.constant 0 : i32
    return %arg0, %c0_i32, %arg1, %c0_i32_0 : i32, i32, i32, i32
  }
}

</mosaic_0001>

<llo_original>
// kernel: reorg_forward.1
$region0: #{reorg_forward.1}
  #allocation0 [shape = 'u32[]', space=smem, size = 0x4, offset = 0x4, fixed_abs, tag = 'smem constant byte address 0x4 - core index']
  #allocation1 [shape = 'u32[72,128]{1,0:T(1,128)}', space=vmem, size = 0x9000, scoped, tag = 'internal scratch']
  %s0 = inlined_call_operand.vmem [shape: f32[2,32,32], index: 0, kind: input, shape index: {}]
  %s1 = inlined_call_operand.vmem [shape: f32[2,4,32,8], index: 1, kind: output, shape index: {}]
  %s2 = sld [smem:[#allocation0]]
  $region37: #{reorg_forward.1} parent=0
    _
  %s4 = ssub.s32 1, %s2
  %s5 = scalar_select 0, %s4, %s2
  loop: start=0, step=1, limit=4
  $region2: #{reorg_forward.1} parent=0 // loop_pre_header
    _
  $region3: #{reorg_forward.1} parent=0 // loop_header
    %s7 = sphi 0, %s11
    %p8 = scmp.ge.s32.totalorder %s7, 4
    %s14 = sphi 0, %s26
    %s15 = sphi 0, %s22
    %s16 = sphi 0, %s14
    %s17 = sphi 0, %s15
    %s18 = sphi 0, %s16
    %s19 = sphi 0, %s17
    %s31 = sphi 0, %s33
    %s34 = sphi 0, %s31
    %s35 = sphi 0, %s34
    %s51 = sphi 0, %s35
    %s59 = sphi 0, %s61
    %s62 = sphi 0, %s59
    %s63 = sphi 0, %s62
    %s79 = sphi 0, %s63
  $region4: #{reorg_forward.1} parent=0 // loop_header_branch
    %10 = sbr.rel (%p8) target = $region8
  $region5: #{reorg_forward.1} parent=0 // loop_body
    %s12 = ssub.s32 %s7, 1
    %s13 = ssub.s32 %s7, 2
    %s20 = sadd.s32 1, %s15
    %p21 = scmp.ge.s32.totalorder %s20, 1
    %s22 = scalar_select %p21, 0, %s20
    %s23 = sadd.s32 1, %s14
    %s24 = scalar_select %p21, %s23, %s14
    %p25 = scmp.ge.s32.totalorder %s24, 2
    %s26 = scalar_select %p25, 0, %s24
    %s27 = ssub.s32 %s14, %s26
    %s28 = ssub.s32 %s15, %s22
    %s29 = sor.u32 %s27, %s28
    %p30 = scmp.eq.s32.totalorder %s29, 0
    %s32 = sadd.s32 %s31, 1
    %s33 = scalar_select %p30, %s31, %s32
    %p36 = pneg %p30
    %p37 = scmp.eq.s32.totalorder %s7, 1
    %p38 = por %p36, %p37
    %p39 = scmp.ne.s32.totalorder %s31, %s34
    %p40 = scmp.eq.s32.totalorder %s7, 0
    %p41 = por %p39, %p40
    %p42 = scmp.ne.s32.totalorder %s31, %s34
    %p43 = scmp.eq.s32.totalorder %s12, 1
    %p44 = por %p42, %p43
    %p45 = scmp.ne.s32.totalorder %s34, %s35
    %p46 = scmp.eq.s32.totalorder %s12, 0
    %p47 = por %p45, %p46
    %p48 = scmp.ne.s32.totalorder %s34, %s35
    %p49 = scmp.eq.s32.totalorder %s13, 1
    %p50 = por %p48, %p49
    %p52 = scmp.ne.s32.totalorder %s35, %s51
    %p53 = scmp.eq.s32.totalorder %s13, 0
    %p54 = por %p52, %p53
    %s55 = ssub.s32 %s14, %s26
    %s56 = ssub.s32 %s15, %s22
    %s57 = sor.u32 %s55, %s56
    %p58 = scmp.eq.s32.totalorder %s57, 0
    %s60 = sadd.s32 %s59, 1
    %s61 = scalar_select %p58, %s59, %s60
    %p64 = pneg %p58
    %p65 = scmp.eq.s32.totalorder %s7, 1
    %p66 = por %p64, %p65
    %p67 = scmp.ne.s32.totalorder %s59, %s62
    %p68 = scmp.eq.s32.totalorder %s7, 0
    %p69 = por %p67, %p68
    %p70 = scmp.ne.s32.totalorder %s59, %s62
    %p71 = scmp.eq.s32.totalorder %s12, 1
    %p72 = por %p70, %p71
    %p73 = scmp.ne.s32.totalorder %s62, %s63
    %p74 = scmp.eq.s32.totalorder %s12, 0
    %p75 = por %p73, %p74
    %p76 = scmp.ne.s32.totalorder %s62, %s63
    %p77 = scmp.eq.s32.totalorder %s13, 1
    %p78 = por %p76, %p77
    %p80 = scmp.ne.s32.totalorder %s63, %s79
    %p81 = scmp.eq.s32.totalorder %s13, 0
    %p82 = por %p80, %p81
    %p83 = scmp.le.s32.totalorder 1, %s7
    %p84 = scmp.lt.s32.totalorder %s7, 3
    %p85 = pnand %p83, %p84
    %p86 = pneg %p85
    // Predicated region
    $region9: #{reorg_forward.1} parent=5 // pred_check
      _
    $region10: #{reorg_forward.1} parent=5 // pred_check_branch
      %88 = sbr.rel (%p85) target = $region12
    $region11: #{reorg_forward.1} parent=5 // pred_region
      %s89 = ssub.s32 %s7, 1
    $region12: #{reorg_forward.1} parent=5 // pred_fallthru
      _
    %p90 = scmp.lt.s32.totalorder %s7, 2
    // Predicated region
    $region13: #{reorg_forward.1} parent=5 // pred_check
      %p91 = pneg %p90
    $region14: #{reorg_forward.1} parent=5 // pred_check_branch
      %93 = sbr.rel (%p91) target = $region16
    $region15: #{reorg_forward.1} parent=5 // pred_region
      // Predicated region
      $region17: #{reorg_forward.1} parent=15 // pred_check
        %p94 = pneg %p41
      $region18: #{reorg_forward.1} parent=15 // pred_check_branch
        %96 = sbr.rel (%p94) target = $region20
      $region19: #{reorg_forward.1} parent=15 // pred_region
        %s97 = smul.u32 4, %s15
        %p98 = scmp.lt.s32.totalorder %s14, 1
        %s99 = scalar_select %p98, %s14, 1
        %p100 = scmp.lt.s32.totalorder %s97, 3
        %s101 = scalar_select %p100, %s97, 3
        %s102 = smul.addr %s99, 4
        %s103 = sadd.s32 %s101, %s102
        %s104 = smul.addr %s103, 8
        %s105 = scalar_lea.vmem %s0, %s104
        %s106 = smul.u32 4, %s15
      $region20: #{reorg_forward.1} parent=15 // pred_fallthru
        _
    $region16: #{reorg_forward.1} parent=5 // pred_fallthru
      _
    %p107 = scmp.le.s32.totalorder 1, %s7
    %p108 = scmp.lt.s32.totalorder %s7, 3
    %p109 = pnand %p107, %p108
    %p110 = pneg %p109
    // Predicated region
    $region21: #{reorg_forward.1} parent=5 // pred_check
      _
    $region22: #{reorg_forward.1} parent=5 // pred_check_branch
      %112 = sbr.rel (%p109) target = $region24
    $region23: #{reorg_forward.1} parent=5 // pred_region
      %s113 = ssub.s32 %s7, 1
      %s114 = smul.u32 4, %s17
      %p115 = scmp.lt.s32.totalorder %s16, 1
      %s116 = scalar_select %p115, %s16, 1
      %p117 = scmp.lt.s32.totalorder %s114, 3
      %s118 = scalar_select %p117, %s114, 3
      %s119 = smul.addr %s116, 4
      %s120 = sadd.s32 %s118, %s119
      %s121 = smul.addr %s120, 8
      %s122 = scalar_lea.vmem %s0, %s121
      %p123 = pneg %p47
      %p124 = pneg %p44
      %p125 = pneg %p75
      %p126 = pneg %p72
      %s127 = smul.u32 4, %s17
      %p128 = scmp.lt.s32.totalorder %s16, 1
      %s129 = scalar_select %p128, %s16, 1
      %p130 = scmp.lt.s32.totalorder %s127, 3
      %s131 = scalar_select %p130, %s127, 3
      %s132 = smul.addr %s129, 16
      %s133 = sadd.s32 %s131, %s132
      %s134 = smul.addr %s133, 8
      %s135 = scalar_lea.vmem %s1, %s134
      %s136 = smul.u32 4, %s17
      %p137 = scmp.lt.s32.totalorder %s16, 1
      %s138 = scalar_select %p137, %s16, 1
      %p139 = scmp.lt.s32.totalorder %s136, 3
      %s140 = scalar_select %p139, %s136, 3
      %s141 = smul.addr %s138, 4
      %s142 = sadd.s32 %s140, %s141
      %s143 = smul.addr %s142, 8
      %s144 = scalar_lea.vmem %s0, %s143
      %s145 = smul.u32 4, %s17
      %s146 = smul.u32 4, %s17
      %p147 = scmp.lt.s32.totalorder %s16, 1
      %s148 = scalar_select %p147, %s16, 1
      %p149 = scmp.lt.s32.totalorder %s146, 3
      %s150 = scalar_select %p149, %s146, 3
      %s151 = smul.addr %s148, 16
      %s152 = sadd.s32 %s150, %s151
      %s153 = smul.addr %s152, 8
      %s154 = scalar_lea.vmem %s1, %s153
      %s155 = smul.u32 4, %s17
      %v156 = vlaneseq
      %v157 = vshrl.u32 %v156, 7
      %v158 = vadd.s32 %v157, 8
      %v159 = vlaneseq
      %v160 = vand.u32 %v159, 127
      %v161 = vmul.u32 %v160, 2
      %vm162 = vcmp.eq.s32.totalorder %v157, %v161
      %vm163 = vcmp.eq.s32.totalorder %v158, %v161
      %v164 = vsel %vm162, 1, 0
      %v165 = vsel %vm163, 1, 0
      %v166 = vcvt.s32.f32 %v164
      %v167 = vcvt.s32.f32 %v165
      %v168 = vadd.s32 %v161, 1
      %vm169 = vcmp.eq.s32.totalorder %v157, %v168
      %vm170 = vcmp.eq.s32.totalorder %v158, %v168
      %v171 = vsel %vm169, 1, 0
      %v172 = vsel %vm170, 1, 0
      %v173 = vcvt.s32.f32 %v171
      %v174 = vcvt.s32.f32 %v172
      %v175 = vld [vmem:[%s144] sm:$0xff]
      %v176 = vld [vmem:[%s144 + $0x8] sm:$0xff]
      %v177 = vld [vmem:[%s144 + $0x10] sm:$0xff]
      %v178 = vld [vmem:[%s144 + $0x18] sm:$0xff]
      %vm179 = vcmask 130048
      %v181 = vsel %vm179, %v175, 0
      %v184 = vsel %vm179, %v176, 0
      %v187 = vsel %vm179, %v177, 0
      %v190 = vsel %vm179, %v178, 0
      %192 = vmatpush.msra.mxu0 0.0
      %193 = vmatpush.msra.mxu0 0.0
      %194 = vmatpush.msra.mxu0 0.0
      %195 = vmatpush.msra.mxu0 0.0
      %196 = vmatpush.msra.mxu0 0.0
      %197 = vmatpush.msra.mxu0 0.0
      %198 = vmatpush.msra.mxu0 0.0
      %199 = vmatpush.msra.mxu0 0.0
      %200 = vmatpush.msra.mxu0 0.0
      %201 = vmatpush.msra.mxu0 0.0
      %202 = vmatpush.msra.mxu0 0.0
      %203 = vmatpush.msra.mxu0 0.0
      %204 = vmatpush.msra.mxu0 0.0
      %205 = vmatpush.msra.mxu0 0.0
      %v206 = vand.u32 %v167, 4294901760
      %207 = vmatpush.msra.mxu0 %v206
      %v208 = vand.u32 %v166, 4294901760
      %209 = vmatpush.msra.mxu0 %v208
      %v210 = vand.u32 %v181, 4294901760
      %v211 = vsub.f32 %v181, %v210
      %v212 = vand.u32 %v211, 4294901760
      %v213 = vsub.f32 %v211, %v212
      %v214 = vand.u32 %v213, 4294901760
      %215 = vmatmul.f32.gmra.mxu0 %v214
      %v216 = vpop.f32.mrf.mxu0
      %v217 = vadd.f32 0.0, %v216
      %v218 = vand.u32 %v184, 4294901760
      %v219 = vsub.f32 %v184, %v218
      %v220 = vand.u32 %v219, 4294901760
      %v221 = vsub.f32 %v219, %v220
      %v222 = vand.u32 %v221, 4294901760
      %223 = vmatmul.f32.gmra.mxu0 %v222
      %v224 = vpop.f32.mrf.mxu0
      %v225 = vadd.f32 0.0, %v224
      %v226 = vand.u32 %v187, 4294901760
      %v227 = vsub.f32 %v187, %v226
      %v228 = vand.u32 %v227, 4294901760
      %v229 = vsub.f32 %v227, %v228
      %v230 = vand.u32 %v229, 4294901760
      %231 = vmatmul.f32.gmra.mxu0 %v230
      %v232 = vpop.f32.mrf.mxu0
      %v233 = vadd.f32 0.0, %v232
      %v234 = vand.u32 %v190, 4294901760
      %v235 = vsub.f32 %v190, %v234
      %v236 = vand.u32 %v235, 4294901760
      %v237 = vsub.f32 %v235, %v236
      %v238 = vand.u32 %v237, 4294901760
      %239 = vmatmul.f32.gmra.mxu0 %v238
      %v240 = vpop.f32.mrf.mxu0
      %v241 = vadd.f32 0.0, %v240
      %242 = vdwg.mxu0
      %243 = vmatpush.msra.mxu0 0.0
      %244 = vmatpush.msra.mxu0 0.0
      %245 = vmatpush.msra.mxu0 0.0
      %246 = vmatpush.msra.mxu0 0.0
      %247 = vmatpush.msra.mxu0 0.0
      %248 = vmatpush.msra.mxu0 0.0
      %249 = vmatpush.msra.mxu0 0.0
      %250 = vmatpush.msra.mxu0 0.0
      %251 = vmatpush.msra.mxu0 0.0
      %252 = vmatpush.msra.mxu0 0.0
      %253 = vmatpush.msra.mxu0 0.0
      %254 = vmatpush.msra.mxu0 0.0
      %255 = vmatpush.msra.mxu0 0.0
      %256 = vmatpush.msra.mxu0 0.0
      %v257 = vand.u32 %v167, 4294901760
      %v258 = vsub.f32 %v167, %v257
      %v259 = vand.u32 %v258, 4294901760
      %v260 = vsub.f32 %v258, %v259
      %v261 = vand.u32 %v260, 4294901760
      %262 = vmatpush.msra.mxu0 %v261
      %v263 = vand.u32 %v166, 4294901760
      %v264 = vsub.f32 %v166, %v263
      %v265 = vand.u32 %v264, 4294901760
      %v266 = vsub.f32 %v264, %v265
      %v267 = vand.u32 %v266, 4294901760
      %268 = vmatpush.msra.mxu0 %v267
      %v269 = vand.u32 %v181, 4294901760
      %270 = vmatmul.f32.gmra.mxu0 %v269
      %v271 = vpop.f32.mrf.mxu0
      %v272 = vadd.f32 %v217, %v271
      %v273 = vand.u32 %v184, 4294901760
      %274 = vmatmul.f32.gmra.mxu0 %v273
      %v275 = vpop.f32.mrf.mxu0
      %v276 = vadd.f32 %v225, %v275
      %v277 = vand.u32 %v187, 4294901760
      %278 = vmatmul.f32.gmra.mxu0 %v277
      %v279 = vpop.f32.mrf.mxu0
      %v280 = vadd.f32 %v233, %v279
      %v281 = vand.u32 %v190, 4294901760
      %282 = vmatmul.f32.gmra.mxu0 %v281
      %v283 = vpop.f32.mrf.mxu0
      %v284 = vadd.f32 %v241, %v283
      %285 = vdwg.mxu0
      %286 = vmatpush.msra.mxu0 0.0
      %287 = vmatpush.msra.mxu0 0.0
      %288 = vmatpush.msra.mxu0 0.0
      %289 = vmatpush.msra.mxu0 0.0
      %290 = vmatpush.msra.mxu0 0.0
      %291 = vmatpush.msra.mxu0 0.0
      %292 = vmatpush.msra.mxu0 0.0
      %293 = vmatpush.msra.mxu0 0.0
      %294 = vmatpush.msra.mxu0 0.0
      %295 = vmatpush.msra.mxu0 0.0
      %296 = vmatpush.msra.mxu0 0.0
      %297 = vmatpush.msra.mxu0 0.0
      %298 = vmatpush.msra.mxu0 0.0
      %299 = vmatpush.msra.mxu0 0.0
      %v300 = vand.u32 %v167, 4294901760
      %v301 = vsub.f32 %v167, %v300
      %302 = vmatpush.msra.mxu0 %v301
      %v303 = vand.u32 %v166, 4294901760
      %v304 = vsub.f32 %v166, %v303
      %305 = vmatpush.msra.mxu0 %v304
      %v306 = vand.u32 %v181, 4294901760
      %v307 = vsub.f32 %v181, %v306
      %308 = vmatmul.f32.gmra.mxu0 %v307
      %v309 = vpop.f32.mrf.mxu0
      %v310 = vadd.f32 %v272, %v309
      %v311 = vand.u32 %v184, 4294901760
      %v312 = vsub.f32 %v184, %v311
      %313 = vmatmul.f32.gmra.mxu0 %v312
      %v314 = vpop.f32.mrf.mxu0
      %v315 = vadd.f32 %v276, %v314
      %v316 = vand.u32 %v187, 4294901760
      %v317 = vsub.f32 %v187, %v316
      %318 = vmatmul.f32.gmra.mxu0 %v317
      %v319 = vpop.f32.mrf.mxu0
      %v320 = vadd.f32 %v280, %v319
      %v321 = vand.u32 %v190, 4294901760
      %v322 = vsub.f32 %v190, %v321
      %323 = vmatmul.f32.gmra.mxu0 %v322
      %v324 = vpop.f32.mrf.mxu0
      %v325 = vadd.f32 %v284, %v324
      %326 = vdwg.mxu0
      %327 = vmatpush.msra.mxu0 0.0
      %328 = vmatpush.msra.mxu0 0.0
      %329 = vmatpush.msra.mxu0 0.0
      %330 = vmatpush.msra.mxu0 0.0
      %331 = vmatpush.msra.mxu0 0.0
      %332 = vmatpush.msra.mxu0 0.0
      %333 = vmatpush.msra.mxu0 0.0
      %334 = vmatpush.msra.mxu0 0.0
      %335 = vmatpush.msra.mxu0 0.0
      %336 = vmatpush.msra.mxu0 0.0
      %337 = vmatpush.msra.mxu0 0.0
      %338 = vmatpush.msra.mxu0 0.0
      %339 = vmatpush.msra.mxu0 0.0
      %340 = vmatpush.msra.mxu0 0.0
      %v341 = vand.u32 %v167, 4294901760
      %342 = vmatpush.msra.mxu0 %v341
      %v343 = vand.u32 %v166, 4294901760
      %344 = vmatpush.msra.mxu0 %v343
      %v345 = vand.u32 %v181, 4294901760
      %v346 = vsub.f32 %v181, %v345
      %v347 = vand.u32 %v346, 4294901760
      %348 = vmatmul.f32.gmra.mxu0 %v347
      %v349 = vpop.f32.mrf.mxu0
      %v350 = vadd.f32 %v310, %v349
      %v351 = vand.u32 %v184, 4294901760
      %v352 = vsub.f32 %v184, %v351
      %v353 = vand.u32 %v352, 4294901760
      %354 = vmatmul.f32.gmra.mxu0 %v353
      %v355 = vpop.f32.mrf.mxu0
      %v356 = vadd.f32 %v315, %v355
      %v357 = vand.u32 %v187, 4294901760
      %v358 = vsub.f32 %v187, %v357
      %v359 = vand.u32 %v358, 4294901760
      %360 = vmatmul.f32.gmra.mxu0 %v359
      %v361 = vpop.f32.mrf.mxu0
      %v362 = vadd.f32 %v320, %v361
      %v363 = vand.u32 %v190, 4294901760
      %v364 = vsub.f32 %v190, %v363
      %v365 = vand.u32 %v364, 4294901760
      %366 = vmatmul.f32.gmra.mxu0 %v365
      %v367 = vpop.f32.mrf.mxu0
      %v368 = vadd.f32 %v325, %v367
      %369 = vdwg.mxu0
      %370 = vmatpush.msra.mxu0 0.0
      %371 = vmatpush.msra.mxu0 0.0
      %372 = vmatpush.msra.mxu0 0.0
      %373 = vmatpush.msra.mxu0 0.0
      %374 = vmatpush.msra.mxu0 0.0
      %375 = vmatpush.msra.mxu0 0.0
      %376 = vmatpush.msra.mxu0 0.0
      %377 = vmatpush.msra.mxu0 0.0
      %378 = vmatpush.msra.mxu0 0.0
      %379 = vmatpush.msra.mxu0 0.0
      %380 = vmatpush.msra.mxu0 0.0
      %381 = vmatpush.msra.mxu0 0.0
      %382 = vmatpush.msra.mxu0 0.0
      %383 = vmatpush.msra.mxu0 0.0
      %v384 = vand.u32 %v167, 4294901760
      %v385 = vsub.f32 %v167, %v384
      %v386 = vand.u32 %v385, 4294901760
      %387 = vmatpush.msra.mxu0 %v386
      %v388 = vand.u32 %v166, 4294901760
      %v389 = vsub.f32 %v166, %v388
      %v390 = vand.u32 %v389, 4294901760
      %391 = vmatpush.msra.mxu0 %v390
      %v392 = vand.u32 %v181, 4294901760
      %393 = vmatmul.f32.gmra.mxu0 %v392
      %v394 = vpop.f32.mrf.mxu0
      %v395 = vadd.f32 %v350, %v394
      %v396 = vand.u32 %v184, 4294901760
      %397 = vmatmul.f32.gmra.mxu0 %v396
      %v398 = vpop.f32.mrf.mxu0
      %v399 = vadd.f32 %v356, %v398
      %v400 = vand.u32 %v187, 4294901760
      %401 = vmatmul.f32.gmra.mxu0 %v400
      %v402 = vpop.f32.mrf.mxu0
      %v403 = vadd.f32 %v362, %v402
      %v404 = vand.u32 %v190, 4294901760
      %405 = vmatmul.f32.gmra.mxu0 %v404
      %v406 = vpop.f32.mrf.mxu0
      %v407 = vadd.f32 %v368, %v406
      %408 = vdwg.mxu0
      %409 = vmatpush.msra.mxu0 0.0
      %410 = vmatpush.msra.mxu0 0.0
      %411 = vmatpush.msra.mxu0 0.0
      %412 = vmatpush.msra.mxu0 0.0
      %413 = vmatpush.msra.mxu0 0.0
      %414 = vmatpush.msra.mxu0 0.0
      %415 = vmatpush.msra.mxu0 0.0
      %416 = vmatpush.msra.mxu0 0.0
      %417 = vmatpush.msra.mxu0 0.0
      %418 = vmatpush.msra.mxu0 0.0
      %419 = vmatpush.msra.mxu0 0.0
      %420 = vmatpush.msra.mxu0 0.0
      %421 = vmatpush.msra.mxu0 0.0
      %422 = vmatpush.msra.mxu0 0.0
      %v423 = vand.u32 %v167, 4294901760
      %424 = vmatpush.msra.mxu0 %v423
      %v425 = vand.u32 %v166, 4294901760
      %426 = vmatpush.msra.mxu0 %v425
      %v427 = vand.u32 %v181, 4294901760
      %428 = vmatmul.f32.gmra.mxu0 %v427
      %v429 = vpop.f32.mrf.mxu0
      %v430 = vadd.f32 %v395, %v429
      %v431 = vand.u32 %v184, 4294901760
      %432 = vmatmul.f32.gmra.mxu0 %v431
      %v433 = vpop.f32.mrf.mxu0
      %v434 = vadd.f32 %v399, %v433
      %v435 = vand.u32 %v187, 4294901760
      %436 = vmatmul.f32.gmra.mxu0 %v435
      %v437 = vpop.f32.mrf.mxu0
      %v438 = vadd.f32 %v403, %v437
      %v439 = vand.u32 %v190, 4294901760
      %440 = vmatmul.f32.gmra.mxu0 %v439
      %v441 = vpop.f32.mrf.mxu0
      %v442 = vadd.f32 %v407, %v441
      %443 = vdwg.mxu0
      %vm444 = vcmask 64512
      %445 = vst.msk [vmem:[%s154] sm:$0xff] %vm444, %v430
      %446 = vst.msk [vmem:[%s154 + $0x8] sm:$0xff] %vm444, %v434
      %447 = vst.msk [vmem:[%s154 + $0x10] sm:$0xff] %vm444, %v438
      %448 = vst.msk [vmem:[%s154 + $0x18] sm:$0xff] %vm444, %v442
      %449 = vmatpush.msra.mxu0 0.0
      %450 = vmatpush.msra.mxu0 0.0
      %451 = vmatpush.msra.mxu0 0.0
      %452 = vmatpush.msra.mxu0 0.0
      %453 = vmatpush.msra.mxu0 0.0
      %454 = vmatpush.msra.mxu0 0.0
      %455 = vmatpush.msra.mxu0 0.0
      %456 = vmatpush.msra.mxu0 0.0
      %457 = vmatpush.msra.mxu0 0.0
      %458 = vmatpush.msra.mxu0 0.0
      %459 = vmatpush.msra.mxu0 0.0
      %460 = vmatpush.msra.mxu0 0.0
      %461 = vmatpush.msra.mxu0 0.0
      %462 = vmatpush.msra.mxu0 0.0
      %v463 = vand.u32 %v174, 4294901760
      %464 = vmatpush.msra.mxu0 %v463
      %v465 = vand.u32 %v173, 4294901760
      %466 = vmatpush.msra.mxu0 %v465
      %v467 = vand.u32 %v181, 4294901760
      %v468 = vsub.f32 %v181, %v467
      %v469 = vand.u32 %v468, 4294901760
      %v470 = vsub.f32 %v468, %v469
      %v471 = vand.u32 %v470, 4294901760
      %472 = vmatmul.f32.gmra.mxu0 %v471
      %v473 = vpop.f32.mrf.mxu0
      %v474 = vadd.f32 0.0, %v473
      %v475 = vand.u32 %v184, 4294901760
      %v476 = vsub.f32 %v184, %v475
      %v477 = vand.u32 %v476, 4294901760
      %v478 = vsub.f32 %v476, %v477
      %v479 = vand.u32 %v478, 4294901760
      %480 = vmatmul.f32.gmra.mxu0 %v479
      %v481 = vpop.f32.mrf.mxu0
      %v482 = vadd.f32 0.0, %v481
      %v483 = vand.u32 %v187, 4294901760
      %v484 = vsub.f32 %v187, %v483
      %v485 = vand.u32 %v484, 4294901760
      %v486 = vsub.f32 %v484, %v485
      %v487 = vand.u32 %v486, 4294901760
      %488 = vmatmul.f32.gmra.mxu0 %v487
      %v489 = vpop.f32.mrf.mxu0
      %v490 = vadd.f32 0.0, %v489
      %v491 = vand.u32 %v190, 4294901760
      %v492 = vsub.f32 %v190, %v491
      %v493 = vand.u32 %v492, 4294901760
      %v494 = vsub.f32 %v492, %v493
      %v495 = vand.u32 %v494, 4294901760
      %496 = vmatmul.f32.gmra.mxu0 %v495
      %v497 = vpop.f32.mrf.mxu0
      %v498 = vadd.f32 0.0, %v497
      %499 = vdwg.mxu0
      %500 = vmatpush.msra.mxu0 0.0
      %501 = vmatpush.msra.mxu0 0.0
      %502 = vmatpush.msra.mxu0 0.0
      %503 = vmatpush.msra.mxu0 0.0
      %504 = vmatpush.msra.mxu0 0.0
      %505 = vmatpush.msra.mxu0 0.0
      %506 = vmatpush.msra.mxu0 0.0
      %507 = vmatpush.msra.mxu0 0.0
      %508 = vmatpush.msra.mxu0 0.0
      %509 = vmatpush.msra.mxu0 0.0
      %510 = vmatpush.msra.mxu0 0.0
      %511 = vmatpush.msra.mxu0 0.0
      %512 = vmatpush.msra.mxu0 0.0
      %513 = vmatpush.msra.mxu0 0.0
      %v514 = vand.u32 %v174, 4294901760
      %v515 = vsub.f32 %v174, %v514
      %v516 = vand.u32 %v515, 4294901760
      %v517 = vsub.f32 %v515, %v516
      %v518 = vand.u32 %v517, 4294901760
      %519 = vmatpush.msra.mxu0 %v518
      %v520 = vand.u32 %v173, 4294901760
      %v521 = vsub.f32 %v173, %v520
      %v522 = vand.u32 %v521, 4294901760
      %v523 = vsub.f32 %v521, %v522
      %v524 = vand.u32 %v523, 4294901760
      %525 = vmatpush.msra.mxu0 %v524
      %v526 = vand.u32 %v181, 4294901760
      %527 = vmatmul.f32.gmra.mxu0 %v526
      %v528 = vpop.f32.mrf.mxu0
      %v529 = vadd.f32 %v474, %v528
      %v530 = vand.u32 %v184, 4294901760
      %531 = vmatmul.f32.gmra.mxu0 %v530
      %v532 = vpop.f32.mrf.mxu0
      %v533 = vadd.f32 %v482, %v532
      %v534 = vand.u32 %v187, 4294901760
      %535 = vmatmul.f32.gmra.mxu0 %v534
      %v536 = vpop.f32.mrf.mxu0
      %v537 = vadd.f32 %v490, %v536
      %v538 = vand.u32 %v190, 4294901760
      %539 = vmatmul.f32.gmra.mxu0 %v538
      %v540 = vpop.f32.mrf.mxu0
      %v541 = vadd.f32 %v498, %v540
      %542 = vdwg.mxu0
      %543 = vmatpush.msra.mxu0 0.0
      %544 = vmatpush.msra.mxu0 0.0
      %545 = vmatpush.msra.mxu0 0.0
      %546 = vmatpush.msra.mxu0 0.0
      %547 = vmatpush.msra.mxu0 0.0
      %548 = vmatpush.msra.mxu0 0.0
      %549 = vmatpush.msra.mxu0 0.0
      %550 = vmatpush.msra.mxu0 0.0
      %551 = vmatpush.msra.mxu0 0.0
      %552 = vmatpush.msra.mxu0 0.0
      %553 = vmatpush.msra.mxu0 0.0
      %554 = vmatpush.msra.mxu0 0.0
      %555 = vmatpush.msra.mxu0 0.0
      %556 = vmatpush.msra.mxu0 0.0
      %v557 = vand.u32 %v174, 4294901760
      %v558 = vsub.f32 %v174, %v557
      %559 = vmatpush.msra.mxu0 %v558
      %v560 = vand.u32 %v173, 4294901760
      %v561 = vsub.f32 %v173, %v560
      %562 = vmatpush.msra.mxu0 %v561
      %v563 = vand.u32 %v181, 4294901760
      %v564 = vsub.f32 %v181, %v563
      %565 = vmatmul.f32.gmra.mxu0 %v564
      %v566 = vpop.f32.mrf.mxu0
      %v567 = vadd.f32 %v529, %v566
      %v568 = vand.u32 %v184, 4294901760
      %v569 = vsub.f32 %v184, %v568
      %570 = vmatmul.f32.gmra.mxu0 %v569
      %v571 = vpop.f32.mrf.mxu0
      %v572 = vadd.f32 %v533, %v571
      %v573 = vand.u32 %v187, 4294901760
      %v574 = vsub.f32 %v187, %v573
      %575 = vmatmul.f32.gmra.mxu0 %v574
      %v576 = vpop.f32.mrf.mxu0
      %v577 = vadd.f32 %v537, %v576
      %v578 = vand.u32 %v190, 4294901760
      %v579 = vsub.f32 %v190, %v578
      %580 = vmatmul.f32.gmra.mxu0 %v579
      %v581 = vpop.f32.mrf.mxu0
      %v582 = vadd.f32 %v541, %v581
      %583 = vdwg.mxu0
      %584 = vmatpush.msra.mxu0 0.0
      %585 = vmatpush.msra.mxu0 0.0
      %586 = vmatpush.msra.mxu0 0.0
      %587 = vmatpush.msra.mxu0 0.0
      %588 = vmatpush.msra.mxu0 0.0
      %589 = vmatpush.msra.mxu0 0.0
      %590 = vmatpush.msra.mxu0 0.0
      %591 = vmatpush.msra.mxu0 0.0
      %592 = vmatpush.msra.mxu0 0.0
      %593 = vmatpush.msra.mxu0 0.0
      %594 = vmatpush.msra.mxu0 0.0
      %595 = vmatpush.msra.mxu0 0.0
      %596 = vmatpush.msra.mxu0 0.0
      %597 = vmatpush.msra.mxu0 0.0
      %v598 = vand.u32 %v174, 4294901760
      %599 = vmatpush.msra.mxu0 %v598
      %v600 = vand.u32 %v173, 4294901760
      %601 = vmatpush.msra.mxu0 %v600
      %v602 = vand.u32 %v181, 4294901760
      %v603 = vsub.f32 %v181, %v602
      %v604 = vand.u32 %v603, 4294901760
      %605 = vmatmul.f32.gmra.mxu0 %v604
      %v606 = vpop.f32.mrf.mxu0
      %v607 = vadd.f32 %v567, %v606
      %v608 = vand.u32 %v184, 4294901760
      %v609 = vsub.f32 %v184, %v608
      %v610 = vand.u32 %v609, 4294901760
      %611 = vmatmul.f32.gmra.mxu0 %v610
      %v612 = vpop.f32.mrf.mxu0
      %v613 = vadd.f32 %v572, %v612
      %v614 = vand.u32 %v187, 4294901760
      %v615 = vsub.f32 %v187, %v614
      %v616 = vand.u32 %v615, 4294901760
      %617 = vmatmul.f32.gmra.mxu0 %v616
      %v618 = vpop.f32.mrf.mxu0
      %v619 = vadd.f32 %v577, %v618
      %v620 = vand.u32 %v190, 4294901760
      %v621 = vsub.f32 %v190, %v620
      %v622 = vand.u32 %v621, 4294901760
      %623 = vmatmul.f32.gmra.mxu0 %v622
      %v624 = vpop.f32.mrf.mxu0
      %v625 = vadd.f32 %v582, %v624
      %626 = vdwg.mxu0
      %627 = vmatpush.msra.mxu0 0.0
      %628 = vmatpush.msra.mxu0 0.0
      %629 = vmatpush.msra.mxu0 0.0
      %630 = vmatpush.msra.mxu0 0.0
      %631 = vmatpush.msra.mxu0 0.0
      %632 = vmatpush.msra.mxu0 0.0
      %633 = vmatpush.msra.mxu0 0.0
      %634 = vmatpush.msra.mxu0 0.0
      %635 = vmatpush.msra.mxu0 0.0
      %636 = vmatpush.msra.mxu0 0.0
      %637 = vmatpush.msra.mxu0 0.0
      %638 = vmatpush.msra.mxu0 0.0
      %639 = vmatpush.msra.mxu0 0.0
      %640 = vmatpush.msra.mxu0 0.0
      %v641 = vand.u32 %v174, 4294901760
      %v642 = vsub.f32 %v174, %v641
      %v643 = vand.u32 %v642, 4294901760
      %644 = vmatpush.msra.mxu0 %v643
      %v645 = vand.u32 %v173, 4294901760
      %v646 = vsub.f32 %v173, %v645
      %v647 = vand.u32 %v646, 4294901760
      %648 = vmatpush.msra.mxu0 %v647
      %v649 = vand.u32 %v181, 4294901760
      %650 = vmatmul.f32.gmra.mxu0 %v649
      %v651 = vpop.f32.mrf.mxu0
      %v652 = vadd.f32 %v607, %v651
      %v653 = vand.u32 %v184, 4294901760
      %654 = vmatmul.f32.gmra.mxu0 %v653
      %v655 = vpop.f32.mrf.mxu0
      %v656 = vadd.f32 %v613, %v655
      %v657 = vand.u32 %v187, 4294901760
      %658 = vmatmul.f32.gmra.mxu0 %v657
      %v659 = vpop.f32.mrf.mxu0
      %v660 = vadd.f32 %v619, %v659
      %v661 = vand.u32 %v190, 4294901760
      %662 = vmatmul.f32.gmra.mxu0 %v661
      %v663 = vpop.f32.mrf.mxu0
      %v664 = vadd.f32 %v625, %v663
      %665 = vdwg.mxu0
      %666 = vmatpush.msra.mxu0 0.0
      %667 = vmatpush.msra.mxu0 0.0
      %668 = vmatpush.msra.mxu0 0.0
      %669 = vmatpush.msra.mxu0 0.0
      %670 = vmatpush.msra.mxu0 0.0
      %671 = vmatpush.msra.mxu0 0.0
      %672 = vmatpush.msra.mxu0 0.0
      %673 = vmatpush.msra.mxu0 0.0
      %674 = vmatpush.msra.mxu0 0.0
      %675 = vmatpush.msra.mxu0 0.0
      %676 = vmatpush.msra.mxu0 0.0
      %677 = vmatpush.msra.mxu0 0.0
      %678 = vmatpush.msra.mxu0 0.0
      %679 = vmatpush.msra.mxu0 0.0
      %v680 = vand.u32 %v174, 4294901760
      %681 = vmatpush.msra.mxu0 %v680
      %v682 = vand.u32 %v173, 4294901760
      %683 = vmatpush.msra.mxu0 %v682
      %v684 = vand.u32 %v181, 4294901760
      %685 = vmatmul.f32.gmra.mxu0 %v684
      %v686 = vpop.f32.mrf.mxu0
      %v687 = vadd.f32 %v652, %v686
      %v688 = vand.u32 %v184, 4294901760
      %689 = vmatmul.f32.gmra.mxu0 %v688
      %v690 = vpop.f32.mrf.mxu0
      %v691 = vadd.f32 %v656, %v690
      %v692 = vand.u32 %v187, 4294901760
      %693 = vmatmul.f32.gmra.mxu0 %v692
      %v694 = vpop.f32.mrf.mxu0
      %v695 = vadd.f32 %v660, %v694
      %v696 = vand.u32 %v190, 4294901760
      %697 = vmatmul.f32.gmra.mxu0 %v696
      %v698 = vpop.f32.mrf.mxu0
      %v699 = vadd.f32 %v664, %v698
      %700 = vdwg.mxu0
      %s701 = scalar_lea.vmem %s154, 32
      %702 = vst.msk [vmem:[%s701] sm:$0xff] %vm444, %v687
      %703 = vst.msk [vmem:[%s701 + $0x8] sm:$0xff] %vm444, %v691
      %704 = vst.msk [vmem:[%s701 + $0x10] sm:$0xff] %vm444, %v695
      %705 = vst.msk [vmem:[%s701 + $0x18] sm:$0xff] %vm444, %v699
      %v706 = vld [vmem:[%s144] sm:$0xff]
      %v707 = vld [vmem:[%s144 + $0x8] sm:$0xff]
      %v708 = vld [vmem:[%s144 + $0x10] sm:$0xff]
      %v709 = vld [vmem:[%s144 + $0x18] sm:$0xff]
      %714 = vrot.lane.b32.xlu0 %v706, 112
      %v715 = vpop.permute.xlu0 %714
      %716 = vrot.lane.b32.xlu0 %v707, 112
      %v717 = vpop.permute.xlu0 %716
      %718 = vrot.lane.b32.xlu0 %v708, 112
      %v719 = vpop.permute.xlu0 %718
      %720 = vrot.lane.b32.xlu0 %v709, 112
      %v721 = vpop.permute.xlu0 %720
      %v722 = vsel %vm179, %v715, 0
      %v724 = vsel %vm179, %v717, 0
      %v726 = vsel %vm179, %v719, 0
      %v728 = vsel %vm179, %v721, 0
      %730 = vmatpush.msra.mxu0 0.0
      %731 = vmatpush.msra.mxu0 0.0
      %732 = vmatpush.msra.mxu0 0.0
      %733 = vmatpush.msra.mxu0 0.0
      %734 = vmatpush.msra.mxu0 0.0
      %735 = vmatpush.msra.mxu0 0.0
      %736 = vmatpush.msra.mxu0 0.0
      %737 = vmatpush.msra.mxu0 0.0
      %738 = vmatpush.msra.mxu0 0.0
      %739 = vmatpush.msra.mxu0 0.0
      %740 = vmatpush.msra.mxu0 0.0
      %741 = vmatpush.msra.mxu0 0.0
      %742 = vmatpush.msra.mxu0 0.0
      %743 = vmatpush.msra.mxu0 0.0
      %v744 = vand.u32 %v167, 4294901760
      %745 = vmatpush.msra.mxu0 %v744
      %v746 = vand.u32 %v166, 4294901760
      %747 = vmatpush.msra.mxu0 %v746
      %v748 = vand.u32 %v722, 4294901760
      %v749 = vsub.f32 %v722, %v748
      %v750 = vand.u32 %v749, 4294901760
      %v751 = vsub.f32 %v749, %v750
      %v752 = vand.u32 %v751, 4294901760
      %753 = vmatmul.f32.gmra.mxu0 %v752
      %v754 = vpop.f32.mrf.mxu0
      %v755 = vadd.f32 0.0, %v754
      %v756 = vand.u32 %v724, 4294901760
      %v757 = vsub.f32 %v724, %v756
      %v758 = vand.u32 %v757, 4294901760
      %v759 = vsub.f32 %v757, %v758
      %v760 = vand.u32 %v759, 4294901760
      %761 = vmatmul.f32.gmra.mxu0 %v760
      %v762 = vpop.f32.mrf.mxu0
      %v763 = vadd.f32 0.0, %v762
      %v764 = vand.u32 %v726, 4294901760
      %v765 = vsub.f32 %v726, %v764
      %v766 = vand.u32 %v765, 4294901760
      %v767 = vsub.f32 %v765, %v766
      %v768 = vand.u32 %v767, 4294901760
      %769 = vmatmul.f32.gmra.mxu0 %v768
      %v770 = vpop.f32.mrf.mxu0
      %v771 = vadd.f32 0.0, %v770
      %v772 = vand.u32 %v728, 4294901760
      %v773 = vsub.f32 %v728, %v772
      %v774 = vand.u32 %v773, 4294901760
      %v775 = vsub.f32 %v773, %v774
      %v776 = vand.u32 %v775, 4294901760
      %777 = vmatmul.f32.gmra.mxu0 %v776
      %v778 = vpop.f32.mrf.mxu0
      %v779 = vadd.f32 0.0, %v778
      %780 = vdwg.mxu0
      %781 = vmatpush.msra.mxu0 0.0
      %782 = vmatpush.msra.mxu0 0.0
      %783 = vmatpush.msra.mxu0 0.0
      %784 = vmatpush.msra.mxu0 0.0
      %785 = vmatpush.msra.mxu0 0.0
      %786 = vmatpush.msra.mxu0 0.0
      %787 = vmatpush.msra.mxu0 0.0
      %788 = vmatpush.msra.mxu0 0.0
      %789 = vmatpush.msra.mxu0 0.0
      %790 = vmatpush.msra.mxu0 0.0
      %791 = vmatpush.msra.mxu0 0.0
      %792 = vmatpush.msra.mxu0 0.0
      %793 = vmatpush.msra.mxu0 0.0
      %794 = vmatpush.msra.mxu0 0.0
      %v795 = vand.u32 %v167, 4294901760
      %v796 = vsub.f32 %v167, %v795
      %v797 = vand.u32 %v796, 4294901760
      %v798 = vsub.f32 %v796, %v797
      %v799 = vand.u32 %v798, 4294901760
      %800 = vmatpush.msra.mxu0 %v799
      %v801 = vand.u32 %v166, 4294901760
      %v802 = vsub.f32 %v166, %v801
      %v803 = vand.u32 %v802, 4294901760
      %v804 = vsub.f32 %v802, %v803
      %v805 = vand.u32 %v804, 4294901760
      %806 = vmatpush.msra.mxu0 %v805
      %v807 = vand.u32 %v722, 4294901760
      %808 = vmatmul.f32.gmra.mxu0 %v807
      %v809 = vpop.f32.mrf.mxu0
      %v810 = vadd.f32 %v755, %v809
      %v811 = vand.u32 %v724, 4294901760
      %812 = vmatmul.f32.gmra.mxu0 %v811
      %v813 = vpop.f32.mrf.mxu0
      %v814 = vadd.f32 %v763, %v813
      %v815 = vand.u32 %v726, 4294901760
      %816 = vmatmul.f32.gmra.mxu0 %v815
      %v817 = vpop.f32.mrf.mxu0
      %v818 = vadd.f32 %v771, %v817
      %v819 = vand.u32 %v728, 4294901760
      %820 = vmatmul.f32.gmra.mxu0 %v819
      %v821 = vpop.f32.mrf.mxu0
      %v822 = vadd.f32 %v779, %v821
      %823 = vdwg.mxu0
      %824 = vmatpush.msra.mxu0 0.0
      %825 = vmatpush.msra.mxu0 0.0
      %826 = vmatpush.msra.mxu0 0.0
      %827 = vmatpush.msra.mxu0 0.0
      %828 = vmatpush.msra.mxu0 0.0
      %829 = vmatpush.msra.mxu0 0.0
      %830 = vmatpush.msra.mxu0 0.0
      %831 = vmatpush.msra.mxu0 0.0
      %832 = vmatpush.msra.mxu0 0.0
      %833 = vmatpush.msra.mxu0 0.0
      %834 = vmatpush.msra.mxu0 0.0
      %835 = vmatpush.msra.mxu0 0.0
      %836 = vmatpush.msra.mxu0 0.0
      %837 = vmatpush.msra.mxu0 0.0
      %v838 = vand.u32 %v167, 4294901760
      %v839 = vsub.f32 %v167, %v838
      %840 = vmatpush.msra.mxu0 %v839
      %v841 = vand.u32 %v166, 4294901760
      %v842 = vsub.f32 %v166, %v841
      %843 = vmatpush.msra.mxu0 %v842
      %v844 = vand.u32 %v722, 4294901760
      %v845 = vsub.f32 %v722, %v844
      %846 = vmatmul.f32.gmra.mxu0 %v845
      %v847 = vpop.f32.mrf.mxu0
      %v848 = vadd.f32 %v810, %v847
      %v849 = vand.u32 %v724, 4294901760
      %v850 = vsub.f32 %v724, %v849
      %851 = vmatmul.f32.gmra.mxu0 %v850
      %v852 = vpop.f32.mrf.mxu0
      %v853 = vadd.f32 %v814, %v852
      %v854 = vand.u32 %v726, 4294901760
      %v855 = vsub.f32 %v726, %v854
      %856 = vmatmul.f32.gmra.mxu0 %v855
      %v857 = vpop.f32.mrf.mxu0
      %v858 = vadd.f32 %v818, %v857
      %v859 = vand.u32 %v728, 4294901760
      %v860 = vsub.f32 %v728, %v859
      %861 = vmatmul.f32.gmra.mxu0 %v860
      %v862 = vpop.f32.mrf.mxu0
      %v863 = vadd.f32 %v822, %v862
      %864 = vdwg.mxu0
      %865 = vmatpush.msra.mxu0 0.0
      %866 = vmatpush.msra.mxu0 0.0
      %867 = vmatpush.msra.mxu0 0.0
      %868 = vmatpush.msra.mxu0 0.0
      %869 = vmatpush.msra.mxu0 0.0
      %870 = vmatpush.msra.mxu0 0.0
      %871 = vmatpush.msra.mxu0 0.0
      %872 = vmatpush.msra.mxu0 0.0
      %873 = vmatpush.msra.mxu0 0.0
      %874 = vmatpush.msra.mxu0 0.0
      %875 = vmatpush.msra.mxu0 0.0
      %876 = vmatpush.msra.mxu0 0.0
      %877 = vmatpush.msra.mxu0 0.0
      %878 = vmatpush.msra.mxu0 0.0
      %v879 = vand.u32 %v167, 4294901760
      %880 = vmatpush.msra.mxu0 %v879
      %v881 = vand.u32 %v166, 4294901760
      %882 = vmatpush.msra.mxu0 %v881
      %v883 = vand.u32 %v722, 4294901760
      %v884 = vsub.f32 %v722, %v883
      %v885 = vand.u32 %v884, 4294901760
      %886 = vmatmul.f32.gmra.mxu0 %v885
      %v887 = vpop.f32.mrf.mxu0
      %v888 = vadd.f32 %v848, %v887
      %v889 = vand.u32 %v724, 4294901760
      %v890 = vsub.f32 %v724, %v889
      %v891 = vand.u32 %v890, 4294901760
      %892 = vmatmul.f32.gmra.mxu0 %v891
      %v893 = vpop.f32.mrf.mxu0
      %v894 = vadd.f32 %v853, %v893
      %v895 = vand.u32 %v726, 4294901760
      %v896 = vsub.f32 %v726, %v895
      %v897 = vand.u32 %v896, 4294901760
      %898 = vmatmul.f32.gmra.mxu0 %v897
      %v899 = vpop.f32.mrf.mxu0
      %v900 = vadd.f32 %v858, %v899
      %v901 = vand.u32 %v728, 4294901760
      %v902 = vsub.f32 %v728, %v901
      %v903 = vand.u32 %v902, 4294901760
      %904 = vmatmul.f32.gmra.mxu0 %v903
      %v905 = vpop.f32.mrf.mxu0
      %v906 = vadd.f32 %v863, %v905
      %907 = vdwg.mxu0
      %908 = vmatpush.msra.mxu0 0.0
      %909 = vmatpush.msra.mxu0 0.0
      %910 = vmatpush.msra.mxu0 0.0
      %911 = vmatpush.msra.mxu0 0.0
      %912 = vmatpush.msra.mxu0 0.0
      %913 = vmatpush.msra.mxu0 0.0
      %914 = vmatpush.msra.mxu0 0.0
      %915 = vmatpush.msra.mxu0 0.0
      %916 = vmatpush.msra.mxu0 0.0
      %917 = vmatpush.msra.mxu0 0.0
      %918 = vmatpush.msra.mxu0 0.0
      %919 = vmatpush.msra.mxu0 0.0
      %920 = vmatpush.msra.mxu0 0.0
      %921 = vmatpush.msra.mxu0 0.0
      %v922 = vand.u32 %v167, 4294901760
      %v923 = vsub.f32 %v167, %v922
      %v924 = vand.u32 %v923, 4294901760
      %925 = vmatpush.msra.mxu0 %v924
      %v926 = vand.u32 %v166, 4294901760
      %v927 = vsub.f32 %v166, %v926
      %v928 = vand.u32 %v927, 4294901760
      %929 = vmatpush.msra.mxu0 %v928
      %v930 = vand.u32 %v722, 4294901760
      %931 = vmatmul.f32.gmra.mxu0 %v930
      %v932 = vpop.f32.mrf.mxu0
      %v933 = vadd.f32 %v888, %v932
      %v934 = vand.u32 %v724, 4294901760
      %935 = vmatmul.f32.gmra.mxu0 %v934
      %v936 = vpop.f32.mrf.mxu0
      %v937 = vadd.f32 %v894, %v936
      %v938 = vand.u32 %v726, 4294901760
      %939 = vmatmul.f32.gmra.mxu0 %v938
      %v940 = vpop.f32.mrf.mxu0
      %v941 = vadd.f32 %v900, %v940
      %v942 = vand.u32 %v728, 4294901760
      %943 = vmatmul.f32.gmra.mxu0 %v942
      %v944 = vpop.f32.mrf.mxu0
      %v945 = vadd.f32 %v906, %v944
      %946 = vdwg.mxu0
      %947 = vmatpush.msra.mxu0 0.0
      %948 = vmatpush.msra.mxu0 0.0
      %949 = vmatpush.msra.mxu0 0.0
      %950 = vmatpush.msra.mxu0 0.0
      %951 = vmatpush.msra.mxu0 0.0
      %952 = vmatpush.msra.mxu0 0.0
      %953 = vmatpush.msra.mxu0 0.0
      %954 = vmatpush.msra.mxu0 0.0
      %955 = vmatpush.msra.mxu0 0.0
      %956 = vmatpush.msra.mxu0 0.0
      %957 = vmatpush.msra.mxu0 0.0
      %958 = vmatpush.msra.mxu0 0.0
      %959 = vmatpush.msra.mxu0 0.0
      %960 = vmatpush.msra.mxu0 0.0
      %v961 = vand.u32 %v167, 4294901760
      %962 = vmatpush.msra.mxu0 %v961
      %v963 = vand.u32 %v166, 4294901760
      %964 = vmatpush.msra.mxu0 %v963
      %v965 = vand.u32 %v722, 4294901760
      %966 = vmatmul.f32.gmra.mxu0 %v965
      %v967 = vpop.f32.mrf.mxu0
      %v968 = vadd.f32 %v933, %v967
      %v969 = vand.u32 %v724, 4294901760
      %970 = vmatmul.f32.gmra.mxu0 %v969
      %v971 = vpop.f32.mrf.mxu0
      %v972 = vadd.f32 %v937, %v971
      %v973 = vand.u32 %v726, 4294901760
      %974 = vmatmul.f32.gmra.mxu0 %v973
      %v975 = vpop.f32.mrf.mxu0
      %v976 = vadd.f32 %v941, %v975
      %v977 = vand.u32 %v728, 4294901760
      %978 = vmatmul.f32.gmra.mxu0 %v977
      %v979 = vpop.f32.mrf.mxu0
      %v980 = vadd.f32 %v945, %v979
      %981 = vdwg.mxu0
      %s982 = scalar_lea.vmem %s154, 64
      %983 = vst.msk [vmem:[%s982] sm:$0xff] %vm444, %v968
      %984 = vst.msk [vmem:[%s982 + $0x8] sm:$0xff] %vm444, %v972
      %985 = vst.msk [vmem:[%s982 + $0x10] sm:$0xff] %vm444, %v976
      %986 = vst.msk [vmem:[%s982 + $0x18] sm:$0xff] %vm444, %v980
      %987 = vmatpush.msra.mxu0 0.0
      %988 = vmatpush.msra.mxu0 0.0
      %989 = vmatpush.msra.mxu0 0.0
      %990 = vmatpush.msra.mxu0 0.0
      %991 = vmatpush.msra.mxu0 0.0
      %992 = vmatpush.msra.mxu0 0.0
      %993 = vmatpush.msra.mxu0 0.0
      %994 = vmatpush.msra.mxu0 0.0
      %995 = vmatpush.msra.mxu0 0.0
      %996 = vmatpush.msra.mxu0 0.0
      %997 = vmatpush.msra.mxu0 0.0
      %998 = vmatpush.msra.mxu0 0.0
      %999 = vmatpush.msra.mxu0 0.0
      %1000 = vmatpush.msra.mxu0 0.0
      %v1001 = vand.u32 %v174, 4294901760
      %1002 = vmatpush.msra.mxu0 %v1001
      %v1003 = vand.u32 %v173, 4294901760
      %1004 = vmatpush.msra.mxu0 %v1003
      %v1005 = vand.u32 %v722, 4294901760
      %v1006 = vsub.f32 %v722, %v1005
      %v1007 = vand.u32 %v1006, 4294901760
      %v1008 = vsub.f32 %v1006, %v1007
      %v1009 = vand.u32 %v1008, 4294901760
      %1010 = vmatmul.f32.gmra.mxu0 %v1009
      %v1011 = vpop.f32.mrf.mxu0
      %v1012 = vadd.f32 0.0, %v1011
      %v1013 = vand.u32 %v724, 4294901760
      %v1014 = vsub.f32 %v724, %v1013
      %v1015 = vand.u32 %v1014, 4294901760
      %v1016 = vsub.f32 %v1014, %v1015
      %v1017 = vand.u32 %v1016, 4294901760
      %1018 = vmatmul.f32.gmra.mxu0 %v1017
      %v1019 = vpop.f32.mrf.mxu0
      %v1020 = vadd.f32 0.0, %v1019
      %v1021 = vand.u32 %v726, 4294901760
      %v1022 = vsub.f32 %v726, %v1021
      %v1023 = vand.u32 %v1022, 4294901760
      %v1024 = vsub.f32 %v1022, %v1023
      %v1025 = vand.u32 %v1024, 4294901760
      %1026 = vmatmul.f32.gmra.mxu0 %v1025
      %v1027 = vpop.f32.mrf.mxu0
      %v1028 = vadd.f32 0.0, %v1027
      %v1029 = vand.u32 %v728, 4294901760
      %v1030 = vsub.f32 %v728, %v1029
      %v1031 = vand.u32 %v1030, 4294901760
      %v1032 = vsub.f32 %v1030, %v1031
      %v1033 = vand.u32 %v1032, 4294901760
      %1034 = vmatmul.f32.gmra.mxu0 %v1033
      %v1035 = vpop.f32.mrf.mxu0
      %v1036 = vadd.f32 0.0, %v1035
      %1037 = vdwg.mxu0
      %1038 = vmatpush.msra.mxu0 0.0
      %1039 = vmatpush.msra.mxu0 0.0
      %1040 = vmatpush.msra.mxu0 0.0
      %1041 = vmatpush.msra.mxu0 0.0
      %1042 = vmatpush.msra.mxu0 0.0
      %1043 = vmatpush.msra.mxu0 0.0
      %1044 = vmatpush.msra.mxu0 0.0
      %1045 = vmatpush.msra.mxu0 0.0
      %1046 = vmatpush.msra.mxu0 0.0
      %1047 = vmatpush.msra.mxu0 0.0
      %1048 = vmatpush.msra.mxu0 0.0
      %1049 = vmatpush.msra.mxu0 0.0
      %1050 = vmatpush.msra.mxu0 0.0
      %1051 = vmatpush.msra.mxu0 0.0
      %v1052 = vand.u32 %v174, 4294901760
      %v1053 = vsub.f32 %v174, %v1052
      %v1054 = vand.u32 %v1053, 4294901760
      %v1055 = vsub.f32 %v1053, %v1054
      %v1056 = vand.u32 %v1055, 4294901760
      %1057 = vmatpush.msra.mxu0 %v1056
      %v1058 = vand.u32 %v173, 4294901760
      %v1059 = vsub.f32 %v173, %v1058
      %v1060 = vand.u32 %v1059, 4294901760
      %v1061 = vsub.f32 %v1059, %v1060
      %v1062 = vand.u32 %v1061, 4294901760
      %1063 = vmatpush.msra.mxu0 %v1062
      %v1064 = vand.u32 %v722, 4294901760
      %1065 = vmatmul.f32.gmra.mxu0 %v1064
      %v1066 = vpop.f32.mrf.mxu0
      %v1067 = vadd.f32 %v1012, %v1066
      %v1068 = vand.u32 %v724, 4294901760
      %1069 = vmatmul.f32.gmra.mxu0 %v1068
      %v1070 = vpop.f32.mrf.mxu0
      %v1071 = vadd.f32 %v1020, %v1070
      %v1072 = vand.u32 %v726, 4294901760
      %1073 = vmatmul.f32.gmra.mxu0 %v1072
      %v1074 = vpop.f32.mrf.mxu0
      %v1075 = vadd.f32 %v1028, %v1074
      %v1076 = vand.u32 %v728, 4294901760
      %1077 = vmatmul.f32.gmra.mxu0 %v1076
      %v1078 = vpop.f32.mrf.mxu0
      %v1079 = vadd.f32 %v1036, %v1078
      %1080 = vdwg.mxu0
      %1081 = vmatpush.msra.mxu0 0.0
      %1082 = vmatpush.msra.mxu0 0.0
      %1083 = vmatpush.msra.mxu0 0.0
      %1084 = vmatpush.msra.mxu0 0.0
      %1085 = vmatpush.msra.mxu0 0.0
      %1086 = vmatpush.msra.mxu0 0.0
      %1087 = vmatpush.msra.mxu0 0.0
      %1088 = vmatpush.msra.mxu0 0.0
      %1089 = vmatpush.msra.mxu0 0.0
      %1090 = vmatpush.msra.mxu0 0.0
      %1091 = vmatpush.msra.mxu0 0.0
      %1092 = vmatpush.msra.mxu0 0.0
      %1093 = vmatpush.msra.mxu0 0.0
      %1094 = vmatpush.msra.mxu0 0.0
      %v1095 = vand.u32 %v174, 4294901760
      %v1096 = vsub.f32 %v174, %v1095
      %1097 = vmatpush.msra.mxu0 %v1096
      %v1098 = vand.u32 %v173, 4294901760
      %v1099 = vsub.f32 %v173, %v1098
      %1100 = vmatpush.msra.mxu0 %v1099
      %v1101 = vand.u32 %v722, 4294901760
      %v1102 = vsub.f32 %v722, %v1101
      %1103 = vmatmul.f32.gmra.mxu0 %v1102
      %v1104 = vpop.f32.mrf.mxu0
      %v1105 = vadd.f32 %v1067, %v1104
      %v1106 = vand.u32 %v724, 4294901760
      %v1107 = vsub.f32 %v724, %v1106
      %1108 = vmatmul.f32.gmra.mxu0 %v1107
      %v1109 = vpop.f32.mrf.mxu0
      %v1110 = vadd.f32 %v1071, %v1109
      %v1111 = vand.u32 %v726, 4294901760
      %v1112 = vsub.f32 %v726, %v1111
      %1113 = vmatmul.f32.gmra.mxu0 %v1112
      %v1114 = vpop.f32.mrf.mxu0
      %v1115 = vadd.f32 %v1075, %v1114
      %v1116 = vand.u32 %v728, 4294901760
      %v1117 = vsub.f32 %v728, %v1116
      %1118 = vmatmul.f32.gmra.mxu0 %v1117
      %v1119 = vpop.f32.mrf.mxu0
      %v1120 = vadd.f32 %v1079, %v1119
      %1121 = vdwg.mxu0
      %1122 = vmatpush.msra.mxu0 0.0
      %1123 = vmatpush.msra.mxu0 0.0
      %1124 = vmatpush.msra.mxu0 0.0
      %1125 = vmatpush.msra.mxu0 0.0
      %1126 = vmatpush.msra.mxu0 0.0
      %1127 = vmatpush.msra.mxu0 0.0
      %1128 = vmatpush.msra.mxu0 0.0
      %1129 = vmatpush.msra.mxu0 0.0
      %1130 = vmatpush.msra.mxu0 0.0
      %1131 = vmatpush.msra.mxu0 0.0
      %1132 = vmatpush.msra.mxu0 0.0
      %1133 = vmatpush.msra.mxu0 0.0
      %1134 = vmatpush.msra.mxu0 0.0
      %1135 = vmatpush.msra.mxu0 0.0
      %v1136 = vand.u32 %v174, 4294901760
      %1137 = vmatpush.msra.mxu0 %v1136
      %v1138 = vand.u32 %v173, 4294901760
      %1139 = vmatpush.msra.mxu0 %v1138
      %v1140 = vand.u32 %v722, 4294901760
      %v1141 = vsub.f32 %v722, %v1140
      %v1142 = vand.u32 %v1141, 4294901760
      %1143 = vmatmul.f32.gmra.mxu0 %v1142
      %v1144 = vpop.f32.mrf.mxu0
      %v1145 = vadd.f32 %v1105, %v1144
      %v1146 = vand.u32 %v724, 4294901760
      %v1147 = vsub.f32 %v724, %v1146
      %v1148 = vand.u32 %v1147, 4294901760
      %1149 = vmatmul.f32.gmra.mxu0 %v1148
      %v1150 = vpop.f32.mrf.mxu0
      %v1151 = vadd.f32 %v1110, %v1150
      %v1152 = vand.u32 %v726, 4294901760
      %v1153 = vsub.f32 %v726, %v1152
      %v1154 = vand.u32 %v1153, 4294901760
      %1155 = vmatmul.f32.gmra.mxu0 %v1154
      %v1156 = vpop.f32.mrf.mxu0
      %v1157 = vadd.f32 %v1115, %v1156
      %v1158 = vand.u32 %v728, 4294901760
      %v1159 = vsub.f32 %v728, %v1158
      %v1160 = vand.u32 %v1159, 4294901760
      %1161 = vmatmul.f32.gmra.mxu0 %v1160
      %v1162 = vpop.f32.mrf.mxu0
      %v1163 = vadd.f32 %v1120, %v1162
      %1164 = vdwg.mxu0
      %1165 = vmatpush.msra.mxu0 0.0
      %1166 = vmatpush.msra.mxu0 0.0
      %1167 = vmatpush.msra.mxu0 0.0
      %1168 = vmatpush.msra.mxu0 0.0
      %1169 = vmatpush.msra.mxu0 0.0
      %1170 = vmatpush.msra.mxu0 0.0
      %1171 = vmatpush.msra.mxu0 0.0
      %1172 = vmatpush.msra.mxu0 0.0
      %1173 = vmatpush.msra.mxu0 0.0
      %1174 = vmatpush.msra.mxu0 0.0
      %1175 = vmatpush.msra.mxu0 0.0
      %1176 = vmatpush.msra.mxu0 0.0
      %1177 = vmatpush.msra.mxu0 0.0
      %1178 = vmatpush.msra.mxu0 0.0
      %v1179 = vand.u32 %v174, 4294901760
      %v1180 = vsub.f32 %v174, %v1179
      %v1181 = vand.u32 %v1180, 4294901760
      %1182 = vmatpush.msra.mxu0 %v1181
      %v1183 = vand.u32 %v173, 4294901760
      %v1184 = vsub.f32 %v173, %v1183
      %v1185 = vand.u32 %v1184, 4294901760
      %1186 = vmatpush.msra.mxu0 %v1185
      %v1187 = vand.u32 %v722, 4294901760
      %1188 = vmatmul.f32.gmra.mxu0 %v1187
      %v1189 = vpop.f32.mrf.mxu0
      %v1190 = vadd.f32 %v1145, %v1189
      %v1191 = vand.u32 %v724, 4294901760
      %1192 = vmatmul.f32.gmra.mxu0 %v1191
      %v1193 = vpop.f32.mrf.mxu0
      %v1194 = vadd.f32 %v1151, %v1193
      %v1195 = vand.u32 %v726, 4294901760
      %1196 = vmatmul.f32.gmra.mxu0 %v1195
      %v1197 = vpop.f32.mrf.mxu0
      %v1198 = vadd.f32 %v1157, %v1197
      %v1199 = vand.u32 %v728, 4294901760
      %1200 = vmatmul.f32.gmra.mxu0 %v1199
      %v1201 = vpop.f32.mrf.mxu0
      %v1202 = vadd.f32 %v1163, %v1201
      %1203 = vdwg.mxu0
      %1204 = vmatpush.msra.mxu0 0.0
      %1205 = vmatpush.msra.mxu0 0.0
      %1206 = vmatpush.msra.mxu0 0.0
      %1207 = vmatpush.msra.mxu0 0.0
      %1208 = vmatpush.msra.mxu0 0.0
      %1209 = vmatpush.msra.mxu0 0.0
      %1210 = vmatpush.msra.mxu0 0.0
      %1211 = vmatpush.msra.mxu0 0.0
      %1212 = vmatpush.msra.mxu0 0.0
      %1213 = vmatpush.msra.mxu0 0.0
      %1214 = vmatpush.msra.mxu0 0.0
      %1215 = vmatpush.msra.mxu0 0.0
      %1216 = vmatpush.msra.mxu0 0.0
      %1217 = vmatpush.msra.mxu0 0.0
      %v1218 = vand.u32 %v174, 4294901760
      %1219 = vmatpush.msra.mxu0 %v1218
      %v1220 = vand.u32 %v173, 4294901760
      %1221 = vmatpush.msra.mxu0 %v1220
      %v1222 = vand.u32 %v722, 4294901760
      %1223 = vmatmul.f32.gmra.mxu0 %v1222
      %v1224 = vpop.f32.mrf.mxu0
      %v1225 = vadd.f32 %v1190, %v1224
      %v1226 = vand.u32 %v724, 4294901760
      %1227 = vmatmul.f32.gmra.mxu0 %v1226
      %v1228 = vpop.f32.mrf.mxu0
      %v1229 = vadd.f32 %v1194, %v1228
      %v1230 = vand.u32 %v726, 4294901760
      %1231 = vmatmul.f32.gmra.mxu0 %v1230
      %v1232 = vpop.f32.mrf.mxu0
      %v1233 = vadd.f32 %v1198, %v1232
      %v1234 = vand.u32 %v728, 4294901760
      %1235 = vmatmul.f32.gmra.mxu0 %v1234
      %v1236 = vpop.f32.mrf.mxu0
      %v1237 = vadd.f32 %v1202, %v1236
      %1238 = vdwg.mxu0
      %s1239 = scalar_lea.vmem %s154, 96
      %1240 = vst.msk [vmem:[%s1239] sm:$0xff] %vm444, %v1225
      %1241 = vst.msk [vmem:[%s1239 + $0x8] sm:$0xff] %vm444, %v1229
      %1242 = vst.msk [vmem:[%s1239 + $0x10] sm:$0xff] %vm444, %v1233
      %1243 = vst.msk [vmem:[%s1239 + $0x18] sm:$0xff] %vm444, %v1237
      %s1244 = smul.u32 4, %s17
      %p1245 = scmp.lt.s32.totalorder %s16, 1
      %s1246 = scalar_select %p1245, %s16, 1
      %p1247 = scmp.lt.s32.totalorder %s1244, 3
      %s1248 = scalar_select %p1247, %s1244, 3
      %s1249 = smul.addr %s1246, 16
      %s1250 = sadd.s32 %s1248, %s1249
      %s1251 = smul.addr %s1250, 8
      %s1252 = scalar_lea.vmem %s1, %s1251
      // Predicated region
      $region25: #{reorg_forward.1} parent=23 // pred_check
        %p1253 = pneg %p72
      $region26: #{reorg_forward.1} parent=23 // pred_check_branch
        %1255 = sbr.rel (%p1253) target = $region28
      $region27: #{reorg_forward.1} parent=23 // pred_region
        %s1256 = smul.u32 4, %s17
      $region28: #{reorg_forward.1} parent=23 // pred_fallthru
        _
    $region24: #{reorg_forward.1} parent=5 // pred_fallthru
      _
    %p1257 = scmp.le.s32.totalorder 2, %s7
    // Predicated region
    $region29: #{reorg_forward.1} parent=5 // pred_check
      %p1258 = pneg %p1257
    $region30: #{reorg_forward.1} parent=5 // pred_check_branch
      %1260 = sbr.rel (%p1258) target = $region32
    $region31: #{reorg_forward.1} parent=5 // pred_region
      %s1261 = ssub.s32 %s7, 2
      // Predicated region
      $region33: #{reorg_forward.1} parent=31 // pred_check
        %p1262 = pneg %p78
      $region34: #{reorg_forward.1} parent=31 // pred_check_branch
        %1264 = sbr.rel (%p1262) target = $region36
      $region35: #{reorg_forward.1} parent=31 // pred_region
        %s1265 = smul.u32 4, %s19
        %p1266 = scmp.lt.s32.totalorder %s18, 1
        %s1267 = scalar_select %p1266, %s18, 1
        %p1268 = scmp.lt.s32.totalorder %s1265, 3
        %s1269 = scalar_select %p1268, %s1265, 3
        %s1270 = smul.addr %s1267, 16
        %s1271 = sadd.s32 %s1269, %s1270
        %s1272 = smul.addr %s1271, 8
        %s1273 = scalar_lea.vmem %s1, %s1272
      $region36: #{reorg_forward.1} parent=31 // pred_fallthru
        _
    $region32: #{reorg_forward.1} parent=5 // pred_fallthru
      _
  $region6: #{reorg_forward.1} parent=0 // loop_footer
    %s11 = sadd.s32 1, %s7
  $region7: #{reorg_forward.1} parent=0 // loop_footer_branch
    %6 = sbr.rel target = $region3
  $region8: #{reorg_forward.1} parent=0 // loop_exit
    _

</llo_original>
